<compile_context>
chip_gen: v7x
topology: tpu7x:2x2x1
jax: 0.10.0
libtpu: 0.0.40
codegen_flags: <defaults>
</compile_context>

<pallas_src>
import math

import jax
import jax.numpy as jnp
from jax.experimental import pallas as pl
from jax.experimental.pallas import tpu as pltpu


def _additive_attn_kernel(q_ref, kt_ref, v_ref, vl_ref,
                          wq_ref, wkt_ref, wv_ref, out_ref):
    # Block shapes: q (BB, Q, dq), kt (BB, dk, K), v (BB, K, Dv),
    # vl (BB, Q, 1) int32, wq (dq, H), wkt (H, dk), wv (H,) in SMEM,
    # out (BB, Q, Dv).
    BB, Q, dq = q_ref.shape
    _, _, K = kt_ref.shape
    H = wq_ref.shape[1]

    # One batched query projection for the whole batch block on the MXU:
    # (BB*Q, dq) @ (dq, H) with f32 accumulation.
    q_flat = q_ref[...].reshape(BB * Q, dq)
    qp = jnp.dot(q_flat, wq_ref[...], preferred_element_type=jnp.float32)  # (BB*Q, H)

    wkt = wkt_ref[...]  # (H, dk)

    for b in range(BB):  # BB is small & static -> fully unrolled at trace time
        # Key projection directly in transposed orientation: (H, dk) @ (dk, K)
        # -> (H, K); K lands on the lane axis, no in-kernel transpose.
        kp_t = jnp.dot(wkt, kt_ref[b], preferred_element_type=jnp.float32)  # (H, K)
        qp_b = qp[b * Q:(b + 1) * Q, :]                                     # (Q, H)

        # scores[q, k] = sum_h w_v[h] * tanh(qp[q, h] + kp_t[h, k])
        # H-slab accumulation over lane-dense (Q, K) tiles: tanh -> EUP,
        # add/mul-acc -> VPU, no (Q, K, H) intermediate, no XLU reduce.
        scores = jnp.zeros((Q, K), jnp.float32)
        for h in range(H):  # H is static -> unrolled
            feats = jnp.tanh(qp_b[:, h:h + 1] + kp_t[h:h + 1, :])  # (Q, K)
            scores = scores + wv_ref[h] * feats                    # scalar from SMEM

        # Masked softmax over the key axis (d2l.sequence_mask with -1e6 fill).
        vl = vl_ref[b]                                              # (Q, 1) int32
        col = jax.lax.broadcasted_iota(jnp.int32, (Q, K), 1)
        masked = jnp.where(col < vl, scores, jnp.float32(-1000000.0))
        m = jnp.max(masked, axis=-1, keepdims=True)
        e = jnp.exp(masked - m)
        w = e / jnp.sum(e, axis=-1, keepdims=True)                  # exact normalization

        # Attention output = weights @ values -> (Q, Dv).
        out = jnp.dot(w.astype(v_ref.dtype), v_ref[b],
                      preferred_element_type=jnp.float32)
        out_ref[b] = out.astype(out_ref.dtype)


def _pick_block_b(B):
    """Largest divisor of B that still leaves >= 2 grid steps (for v7x's 2 TCs)."""
    if B <= 1:
        return 1
    target = max(1, B // 2)
    for bb in range(target, 0, -1):
        if B % bb == 0:
            return bb
    return 1


def additive_attention(queries, keys, values, valid_lens, w_q, w_k, w_v):
    """Pallas implementation of AdditiveAttention.forward (dropout = identity).

    queries: (B, Q, query_size), keys: (B, K, key_size), values: (B, K, Dv)
    valid_lens: (B,) or (B, Q) integer lengths
    w_q: (query_size, H), w_k: (key_size, H)  -- PyTorch Linear weights transposed
    w_v: (H,)                                 -- PyTorch w_v.weight.reshape(-1)
    """
    B, Q, dq = queries.shape
    Bk, K, dk = keys.shape
    Bv, Kv, Dv = values.shape
    dq2, H = w_q.shape
    dk2, Hk = w_k.shape
    assert B == Bk == Bv and K == Kv and dq == dq2 and dk == dk2 and H == Hk
    assert w_v.shape == (H,)

    # Layout plumbing done once on the XLA side (outside the kernel):
    #   keys   -> (B, dk, K)  so the kernel's key projection is lane-dense in K
    #   w_k    -> (H, dk)     (PyTorch's native orientation)
    #   valid  -> (B, Q, 1) int32, supporting per-batch or per-query lengths
    keys_t = jnp.swapaxes(keys, 1, 2)
    w_kt = jnp.swapaxes(w_k, 0, 1)
    if valid_lens.ndim == 1:
        valid_mat = jnp.broadcast_to(valid_lens[:, None], (B, Q))
    else:
        assert valid_lens.shape == (B, Q)
        valid_mat = valid_lens
    valid_mat = valid_mat.astype(jnp.int32)[:, :, None]  # (B, Q, 1)

    BB = _pick_block_b(B)
    NB = B // BB

    in_specs = [
        pl.BlockSpec((BB, Q, dq), lambda i: (i, 0, 0)),       # queries
        pl.BlockSpec((BB, dk, K), lambda i: (i, 0, 0)),       # keys^T
        pl.BlockSpec((BB, K, Dv), lambda i: (i, 0, 0)),       # values
        pl.BlockSpec((BB, Q, 1), lambda i: (i, 0, 0)),        # valid lens
        pl.BlockSpec((dq, H), lambda i: (0, 0)),              # W_q (VMEM-resident)
        pl.BlockSpec((H, dk), lambda i: (0, 0)),              # W_k^T (VMEM-resident)
        pl.BlockSpec(memory_space=pltpu.MemorySpace.SMEM),    # w_v scalars
    ]
    out_specs = pl.BlockSpec((BB, Q, Dv), lambda i: (i, 0, 0))

    return pl.pallas_call(
        _additive_attn_kernel,
        out_shape=jax.ShapeDtypeStruct((B, Q, Dv), queries.dtype),
        grid=(NB,),
        in_specs=in_specs,
        out_specs=out_specs,
        compiler_params=pltpu.CompilerParams(dimension_semantics=("parallel",)),
    )(queries, keys_t, values, valid_mat, w_q, w_kt, w_v)


def _reference(queries, keys, values, valid_lens, w_q, w_k, w_v):
    """Plain-JAX reference reproducing the PyTorch AdditiveAttention semantics."""
    B, Q, _ = queries.shape
    qp = queries @ w_q                                          # (B, Q, H)
    kp = keys @ w_k                                             # (B, K, H)
    feats = jnp.tanh(qp[:, :, None, :] + kp[:, None, :, :])     # (B, Q, K, H)
    scores = jnp.einsum("bqkh,h->bqk", feats, w_v)
    if valid_lens.ndim == 1:
        vl = jnp.broadcast_to(valid_lens[:, None], (B, Q))
    else:
        vl = valid_lens
    col = jnp.arange(scores.shape[-1])[None, None, :]
    masked = jnp.where(col < vl[:, :, None], scores, -1000000.0)
    w = jax.nn.softmax(masked, axis=-1)
    return jnp.einsum("bqk,bkv->bqv", w, values)


if __name__ == "__main__":
    key = jax.random.PRNGKey(0)
    kq, kk, k1, k2, k3 = jax.random.split(key, 5)

    # Shapes consistent with the demo: queries (2,1,2), keys (2,10,2),
    # values (2,10,4), valid_lens = [2, 6], num_hiddens = 8.
    B, Q, K, Dv = 2, 1, 10, 4
    query_size, key_size, num_hiddens = 2, 2, 8

    queries = jax.random.normal(kq, (B, Q, query_size), dtype=jnp.float32)
    keys = jax.random.normal(kk, (B, K, key_size), dtype=jnp.float32)
    values = jnp.tile(
        jnp.arange(40, dtype=jnp.float32).reshape(1, K, Dv), (B, 1, 1))
    valid_lens = jnp.array([2, 6], dtype=jnp.int32)

    # Deterministic "trained" weights, stored as (in_features, out_features);
    # w_v is flattened to (num_hiddens,).
    w_q = jax.random.normal(k1, (query_size, num_hiddens), jnp.float32) / math.sqrt(query_size)
    w_k = jax.random.normal(k2, (key_size, num_hiddens), jnp.float32) / math.sqrt(key_size)
    w_v = jax.random.normal(k3, (num_hiddens,), jnp.float32) / math.sqrt(num_hiddens)

    out = additive_attention(queries, keys, values, valid_lens, w_q, w_k, w_v)
    out = jax.block_until_ready(out)

    ref = _reference(queries, keys, values, valid_lens, w_q, w_k, w_v)
    assert out.shape == (B, Q, Dv)
    assert jnp.allclose(out, ref, atol=1e-4, rtol=1e-4), (out, ref)

    # Also exercise the 2-D (per-query) valid_lens path of masked_softmax.
    valid_lens_2d = jnp.tile(valid_lens[:, None], (1, Q))
    out2 = jax.block_until_ready(
        additive_attention(queries, keys, values, valid_lens_2d, w_q, w_k, w_v))
    ref2 = _reference(queries, keys, values, valid_lens_2d, w_q, w_k, w_v)
    assert jnp.allclose(out2, ref2, atol=1e-4, rtol=1e-4), (out2, ref2)

    print("KERNEL_OK")
</pallas_src>

<mosaic_0001>
module attributes {stable_mosaic.version = 11 : i64} {
  func.func @_additive_attn_kernel(%arg0: i32, %arg1: memref<1x1x2xf32, #tpu.memory_space<vmem>>, %arg2: memref<1x2x10xf32, #tpu.memory_space<vmem>>, %arg3: memref<1x10x4xf32, #tpu.memory_space<vmem>>, %arg4: memref<1x1x1xi32, #tpu.memory_space<vmem>>, %arg5: memref<2x8xf32, #tpu.memory_space<vmem>>, %arg6: memref<8x2xf32, #tpu.memory_space<vmem>>, %arg7: memref<8xf32, #tpu.memory_space<smem>>, %arg8: memref<1x1x4xf32, #tpu.memory_space<vmem>>) attributes {dimension_semantics = [#tpu.dimension_semantics<parallel>], iteration_bounds = array<i64: 2>, scalar_prefetch = 0 : i64, scratch_operands = 0 : i64, tpu.core_type = #tpu.core_type<tc>, window_params = [{transform_indices = @transform_0, window_bounds = array<i64: 1, 1, 2>}, {transform_indices = @transform_1, window_bounds = array<i64: 1, 2, 10>}, {transform_indices = @transform_2, window_bounds = array<i64: 1, 10, 4>}, {transform_indices = @transform_3, window_bounds = array<i64: 1, 1, 1>}, {pipeline_mode = #tpu.pipeline_mode<synchronous>, transform_indices = @transform_4, window_bounds = array<i64: 2, 8>}, {pipeline_mode = #tpu.pipeline_mode<synchronous>, transform_indices = @transform_5, window_bounds = array<i64: 8, 2>}, {transform_indices = @transform_6, window_bounds = array<i64: 8>}, {transform_indices = @transform_7, window_bounds = array<i64: 1, 1, 4>}]} {
    %c0 = arith.constant 0 : index
    %c0_0 = arith.constant 0 : index
    %c0_1 = arith.constant 0 : index
    %0 = vector.load %arg1[%c0, %c0_0, %c0_1] : memref<1x1x2xf32, #tpu.memory_space<vmem>>, vector<1x1x2xf32>
    %1 = vector.shape_cast %0 : vector<1x1x2xf32> to vector<1x2xf32>
    %c0_2 = arith.constant 0 : index
    %c0_3 = arith.constant 0 : index
    %2 = vector.load %arg5[%c0_2, %c0_3] : memref<2x8xf32, #tpu.memory_space<vmem>>, vector<2x8xf32>
    %cst = arith.constant dense<0.000000e+00> : vector<1x8xf32>
    %3 = tpu.matmul %1, %2, %cst {dimension_numbers = #tpu.dot_dimension_numbers<[1], [0], [0], [1], [0, 0, 1, 1], [], []>} : vector<1x2xf32>, vector<2x8xf32>, vector<1x8xf32> -> vector<1x8xf32>
    %c0_4 = arith.constant 0 : index
    %c0_5 = arith.constant 0 : index
    %4 = vector.load %arg6[%c0_4, %c0_5] : memref<8x2xf32, #tpu.memory_space<vmem>>, vector<8x2xf32>
    %c0_6 = arith.constant 0 : index
    %c0_7 = arith.constant 0 : index
    %c0_8 = arith.constant 0 : index
    %5 = vector.load %arg2[%c0_6, %c0_7, %c0_8] : memref<1x2x10xf32, #tpu.memory_space<vmem>>, vector<1x2x10xf32>
    %6 = vector.shape_cast %5 : vector<1x2x10xf32> to vector<2x10xf32>
    %cst_9 = arith.constant dense<0.000000e+00> : vector<8x10xf32>
    %7 = tpu.matmul %4, %6, %cst_9 {dimension_numbers = #tpu.dot_dimension_numbers<[1], [0], [0], [1], [0, 0, 1, 1], [], []>} : vector<8x2xf32>, vector<2x10xf32>, vector<8x10xf32> -> vector<8x10xf32>
    %cst_10 = arith.constant 0.000000e+00 : f32
    %8 = vector.broadcast %cst_10 : f32 to vector<1x10xf32>
    %9 = vector.extract_strided_slice %3 {offsets = [0, 0], sizes = [1, 1], strides = [1, 1]} : vector<1x8xf32> to vector<1x1xf32>
    %10 = vector.extract_strided_slice %7 {offsets = [0, 0], sizes = [1, 10], strides = [1, 1]} : vector<8x10xf32> to vector<1x10xf32>
    %11 = vector.broadcast %9 : vector<1x1xf32> to vector<1x10xf32>
    %12 = arith.addf %11, %10 : vector<1x10xf32>
    %13 = math.tanh %12 : vector<1x10xf32>
    %c0_11 = arith.constant 0 : index
    %14 = memref.load %arg7[%c0_11] : memref<8xf32, #tpu.memory_space<smem>>
    %15 = vector.broadcast %14 : f32 to vector<1x10xf32>
    %16 = arith.mulf %15, %13 : vector<1x10xf32>
    %17 = arith.addf %8, %16 : vector<1x10xf32>
    %18 = vector.extract_strided_slice %3 {offsets = [0, 1], sizes = [1, 1], strides = [1, 1]} : vector<1x8xf32> to vector<1x1xf32>
    %19 = vector.extract_strided_slice %7 {offsets = [1, 0], sizes = [1, 10], strides = [1, 1]} : vector<8x10xf32> to vector<1x10xf32>
    %20 = vector.broadcast %18 : vector<1x1xf32> to vector<1x10xf32>
    %21 = arith.addf %20, %19 : vector<1x10xf32>
    %22 = math.tanh %21 : vector<1x10xf32>
    %c1 = arith.constant 1 : index
    %23 = memref.load %arg7[%c1] : memref<8xf32, #tpu.memory_space<smem>>
    %24 = vector.broadcast %23 : f32 to vector<1x10xf32>
    %25 = arith.mulf %24, %22 : vector<1x10xf32>
    %26 = arith.addf %17, %25 : vector<1x10xf32>
    %27 = vector.extract_strided_slice %3 {offsets = [0, 2], sizes = [1, 1], strides = [1, 1]} : vector<1x8xf32> to vector<1x1xf32>
    %28 = vector.extract_strided_slice %7 {offsets = [2, 0], sizes = [1, 10], strides = [1, 1]} : vector<8x10xf32> to vector<1x10xf32>
    %29 = vector.broadcast %27 : vector<1x1xf32> to vector<1x10xf32>
    %30 = arith.addf %29, %28 : vector<1x10xf32>
    %31 = math.tanh %30 : vector<1x10xf32>
    %c2 = arith.constant 2 : index
    %32 = memref.load %arg7[%c2] : memref<8xf32, #tpu.memory_space<smem>>
    %33 = vector.broadcast %32 : f32 to vector<1x10xf32>
    %34 = arith.mulf %33, %31 : vector<1x10xf32>
    %35 = arith.addf %26, %34 : vector<1x10xf32>
    %36 = vector.extract_strided_slice %3 {offsets = [0, 3], sizes = [1, 1], strides = [1, 1]} : vector<1x8xf32> to vector<1x1xf32>
    %37 = vector.extract_strided_slice %7 {offsets = [3, 0], sizes = [1, 10], strides = [1, 1]} : vector<8x10xf32> to vector<1x10xf32>
    %38 = vector.broadcast %36 : vector<1x1xf32> to vector<1x10xf32>
    %39 = arith.addf %38, %37 : vector<1x10xf32>
    %40 = math.tanh %39 : vector<1x10xf32>
    %c3 = arith.constant 3 : index
    %41 = memref.load %arg7[%c3] : memref<8xf32, #tpu.memory_space<smem>>
    %42 = vector.broadcast %41 : f32 to vector<1x10xf32>
    %43 = arith.mulf %42, %40 : vector<1x10xf32>
    %44 = arith.addf %35, %43 : vector<1x10xf32>
    %45 = vector.extract_strided_slice %3 {offsets = [0, 4], sizes = [1, 1], strides = [1, 1]} : vector<1x8xf32> to vector<1x1xf32>
    %46 = vector.extract_strided_slice %7 {offsets = [4, 0], sizes = [1, 10], strides = [1, 1]} : vector<8x10xf32> to vector<1x10xf32>
    %47 = vector.broadcast %45 : vector<1x1xf32> to vector<1x10xf32>
    %48 = arith.addf %47, %46 : vector<1x10xf32>
    %49 = math.tanh %48 : vector<1x10xf32>
    %c4 = arith.constant 4 : index
    %50 = memref.load %arg7[%c4] : memref<8xf32, #tpu.memory_space<smem>>
    %51 = vector.broadcast %50 : f32 to vector<1x10xf32>
    %52 = arith.mulf %51, %49 : vector<1x10xf32>
    %53 = arith.addf %44, %52 : vector<1x10xf32>
    %54 = vector.extract_strided_slice %3 {offsets = [0, 5], sizes = [1, 1], strides = [1, 1]} : vector<1x8xf32> to vector<1x1xf32>
    %55 = vector.extract_strided_slice %7 {offsets = [5, 0], sizes = [1, 10], strides = [1, 1]} : vector<8x10xf32> to vector<1x10xf32>
    %56 = vector.broadcast %54 : vector<1x1xf32> to vector<1x10xf32>
    %57 = arith.addf %56, %55 : vector<1x10xf32>
    %58 = math.tanh %57 : vector<1x10xf32>
    %c5 = arith.constant 5 : index
    %59 = memref.load %arg7[%c5] : memref<8xf32, #tpu.memory_space<smem>>
    %60 = vector.broadcast %59 : f32 to vector<1x10xf32>
    %61 = arith.mulf %60, %58 : vector<1x10xf32>
    %62 = arith.addf %53, %61 : vector<1x10xf32>
    %63 = vector.extract_strided_slice %3 {offsets = [0, 6], sizes = [1, 1], strides = [1, 1]} : vector<1x8xf32> to vector<1x1xf32>
    %64 = vector.extract_strided_slice %7 {offsets = [6, 0], sizes = [1, 10], strides = [1, 1]} : vector<8x10xf32> to vector<1x10xf32>
    %65 = vector.broadcast %63 : vector<1x1xf32> to vector<1x10xf32>
    %66 = arith.addf %65, %64 : vector<1x10xf32>
    %67 = math.tanh %66 : vector<1x10xf32>
    %c6 = arith.constant 6 : index
    %68 = memref.load %arg7[%c6] : memref<8xf32, #tpu.memory_space<smem>>
    %69 = vector.broadcast %68 : f32 to vector<1x10xf32>
    %70 = arith.mulf %69, %67 : vector<1x10xf32>
    %71 = arith.addf %62, %70 : vector<1x10xf32>
    %72 = vector.extract_strided_slice %3 {offsets = [0, 7], sizes = [1, 1], strides = [1, 1]} : vector<1x8xf32> to vector<1x1xf32>
    %73 = vector.extract_strided_slice %7 {offsets = [7, 0], sizes = [1, 10], strides = [1, 1]} : vector<8x10xf32> to vector<1x10xf32>
    %74 = vector.broadcast %72 : vector<1x1xf32> to vector<1x10xf32>
    %75 = arith.addf %74, %73 : vector<1x10xf32>
    %76 = math.tanh %75 : vector<1x10xf32>
    %c7 = arith.constant 7 : index
    %77 = memref.load %arg7[%c7] : memref<8xf32, #tpu.memory_space<smem>>
    %78 = vector.broadcast %77 : f32 to vector<1x10xf32>
    %79 = arith.mulf %78, %76 : vector<1x10xf32>
    %80 = arith.addf %71, %79 : vector<1x10xf32>
    %c0_12 = arith.constant 0 : index
    %c0_13 = arith.constant 0 : index
    %c0_14 = arith.constant 0 : index
    %81 = vector.load %arg4[%c0_12, %c0_13, %c0_14] : memref<1x1x1xi32, #tpu.memory_space<vmem>>, vector<1x1x1xi32>
    %82 = vector.shape_cast %81 : vector<1x1x1xi32> to vector<1x1xi32>
    %83 = tpu.iota {dimensions = array<i32: 1>} : vector<1x10xi32>
    %84 = vector.broadcast %82 : vector<1x1xi32> to vector<1x10xi32>
    %85 = arith.cmpi slt, %83, %84 : vector<1x10xi32>
    %cst_15 = arith.constant -1.000000e+06 : f32
    %86 = vector.broadcast %cst_15 : f32 to vector<1x10xf32>
    %87 = arith.select %85, %80, %86 : vector<1x10xi1>, vector<1x10xf32>
    %cst_16 = arith.constant dense<0xFF800000> : vector<1xf32>
    %88 = vector.multi_reduction <maximumf>, %87, %cst_16 [1] : vector<1x10xf32> to vector<1xf32>
    %89 = vector.shape_cast %88 : vector<1xf32> to vector<1x1xf32>
    %90 = vector.broadcast %89 : vector<1x1xf32> to vector<1x10xf32>
    %91 = arith.subf %87, %90 : vector<1x10xf32>
    %92 = math.exp %91 : vector<1x10xf32>
    %cst_17 = arith.constant dense<0.000000e+00> : vector<1xf32>
    %93 = vector.multi_reduction <add>, %92, %cst_17 [1] : vector<1x10xf32> to vector<1xf32>
    %94 = vector.shape_cast %93 : vector<1xf32> to vector<1x1xf32>
    %95 = vector.broadcast %94 : vector<1x1xf32> to vector<1x10xf32>
    %96 = arith.divf %92, %95 : vector<1x10xf32>
    %c0_18 = arith.constant 0 : index
    %c0_19 = arith.constant 0 : index
    %c0_20 = arith.constant 0 : index
    %97 = vector.load %arg3[%c0_18, %c0_19, %c0_20] : memref<1x10x4xf32, #tpu.memory_space<vmem>>, vector<1x10x4xf32>
    %98 = vector.shape_cast %97 : vector<1x10x4xf32> to vector<10x4xf32>
    %cst_21 = arith.constant dense<0.000000e+00> : vector<1x4xf32>
    %99 = tpu.matmul %96, %98, %cst_21 {dimension_numbers = #tpu.dot_dimension_numbers<[1], [0], [0], [1], [0, 0, 1, 1], [], []>} : vector<1x10xf32>, vector<10x4xf32>, vector<1x4xf32> -> vector<1x4xf32>
    %c0_22 = arith.constant 0 : index
    %c0_23 = arith.constant 0 : index
    %c0_24 = arith.constant 0 : index
    %100 = vector.load %arg8[%c0_22, %c0_23, %c0_24] : memref<1x1x4xf32, #tpu.memory_space<vmem>>, vector<1x1x4xf32>
    %101 = vector.shape_cast %100 : vector<1x1x4xf32> to vector<1x4xf32>
    %102 = vector.shape_cast %99 : vector<1x4xf32> to vector<1x1x4xf32>
    tpu.vector_store %arg8[%c0_22, %c0_23, %c0_24], %102 {strides = array<i32>} : memref<1x1x4xf32, #tpu.memory_space<vmem>>, vector<1x1x4xf32>,
    return
  }
  func.func @transform_0(%arg0: i32) -> (i32, i32, i32) {
    %c0_i32 = arith.constant 0 : i32
    %c0_i32_0 = arith.constant 0 : i32
    %c0_i32_1 = arith.constant 0 : i32
    return %arg0, %c0_i32, %c0_i32_0 : i32, i32, i32
  }
  func.func @transform_1(%arg0: i32) -> (i32, i32, i32) {
    %c0_i32 = arith.constant 0 : i32
    %c0_i32_0 = arith.constant 0 : i32
    %c0_i32_1 = arith.constant 0 : i32
    return %arg0, %c0_i32, %c0_i32_0 : i32, i32, i32
  }
  func.func @transform_2(%arg0: i32) -> (i32, i32, i32) {
    %c0_i32 = arith.constant 0 : i32
    %c0_i32_0 = arith.constant 0 : i32
    %c0_i32_1 = arith.constant 0 : i32
    return %arg0, %c0_i32, %c0_i32_0 : i32, i32, i32
  }
  func.func @transform_3(%arg0: i32) -> (i32, i32, i32) {
    %c0_i32 = arith.constant 0 : i32
    %c0_i32_0 = arith.constant 0 : i32
    %c0_i32_1 = arith.constant 0 : i32
    return %arg0, %c0_i32, %c0_i32_0 : i32, i32, i32
  }
  func.func @transform_4(%arg0: i32) -> (i32, i32) {
    %c0_i32 = arith.constant 0 : i32
    %c0_i32_0 = arith.constant 0 : i32
    %c0_i32_1 = arith.constant 0 : i32
    return %c0_i32, %c0_i32_0 : i32, i32
  }
  func.func @transform_5(%arg0: i32) -> (i32, i32) {
    %c0_i32 = arith.constant 0 : i32
    %c0_i32_0 = arith.constant 0 : i32
    %c0_i32_1 = arith.constant 0 : i32
    return %c0_i32, %c0_i32_0 : i32, i32
  }
  func.func @transform_6(%arg0: i32) -> i32 {
    %c0_i32 = arith.constant 0 : i32
    %c0_i32_0 = arith.constant 0 : i32
    return %c0_i32 : i32
  }
  func.func @transform_7(%arg0: i32) -> (i32, i32, i32) {
    %c0_i32 = arith.constant 0 : i32
    %c0_i32_0 = arith.constant 0 : i32
    %c0_i32_1 = arith.constant 0 : i32
    return %arg0, %c0_i32, %c0_i32_0 : i32, i32, i32
  }
}

</mosaic_0001>

<llo_original>
// kernel: tpu_custom_call.1
$region0: #{tpu_custom_call.1}
  #allocation0 [shape = 'u32[]', space=smem, size = 0x4, offset = 0x4, fixed_abs, tag = 'smem constant byte address 0x4 - core index']
  #allocation1 [shape = 'u32[144,128]{1,0:T(1,128)}', space=vmem, size = 0x12000, scoped, tag = 'internal scratch']
  %s0 = inlined_call_operand.vmem [shape: f32[2,1,2], index: 0, kind: input, shape index: {}]
  %s1 = inlined_call_operand.vmem [shape: f32[2,2,10], index: 1, kind: input, shape index: {}]
  %s2 = inlined_call_operand.vmem [shape: f32[2,10,4], index: 2, kind: input, shape index: {}]
  %s3 = inlined_call_operand.vmem [shape: s32[2,1,1], index: 3, kind: input, shape index: {}]
  %s4 = inlined_call_operand.vmem [shape: f32[2,8], index: 4, kind: input, shape index: {}]
  %s5 = inlined_call_operand.vmem [shape: f32[8,2], index: 5, kind: input, shape index: {}]
  %s6 = inlined_call_operand.vmem [shape: f32[8], index: 6, kind: input, shape index: {}]
  %s7 = inlined_call_operand.hbm [shape: f32[2,1,4], index: 7, kind: output, shape index: {}]
  %s8 = sld [smem:[#allocation0]]
  $region65: #{tpu_custom_call.1} parent=0
    _
  %s10 = ssub.s32 1, %s8
  %s11 = scalar_select 0, %s10, %s8
  $region1: #{tpu_custom_call.1} parent=0
    #allocation2 [shape = 'u8[512]{0}', space=smem, size = 0x200, scoped, tag = 'input window, operand 6, single buffered']
    #allocation3 [shape = 's32[2]{0}', space=sflag, size = 0x8, scoped, tag = 'scoped memory for tpu_custom_call.1']
    #allocation4 [shape = 's32[2]{0}', space=sflag, size = 0x8, scoped, tag = 'scoped memory for tpu_custom_call.1']
    #allocation5 [shape = 'u8[1024]{0}', space=vmem, size = 0x400, scoped, tag = 'output window, operand 0']
    %12 = vsyncpa [#allocation4], 0
    %13 = vsyncpa [#allocation3], 0
    %s14 = scalar_lea.sflag [#allocation3], 1
    %15 = vsyncpa %s14, 0
    loop: start=0, step=1, limit=4
    $region2: #{tpu_custom_call.1} parent=1 // loop_pre_header
      _
    $region3: #{tpu_custom_call.1} parent=1 // loop_header
      %s17 = sphi 0, %s21
      %p18 = scmp.ge.s32.totalorder %s17, 4
      %s27 = sphi 0, %s29
      %s30 = sphi 0, %s27
      %s31 = sphi 0, %s30
      %s47 = sphi 0, %s31
      %s53 = sphi 0, %s55
      %s56 = sphi 0, %s53
      %s57 = sphi 0, %s56
      %s73 = sphi 0, %s57
      %s79 = sphi 0, %s81
      %s82 = sphi 0, %s79
      %s83 = sphi 0, %s82
      %s99 = sphi 0, %s83
      %s105 = sphi 0, %s107
      %s108 = sphi 0, %s105
      %s109 = sphi 0, %s108
      %s125 = sphi 0, %s109
      %s129 = sphi 0, %s129
      %s131 = sphi 0, %s129
      %s132 = sphi 0, %s131
      %s146 = sphi 0, %s132
      %s150 = sphi 0, %s150
      %s152 = sphi 0, %s150
      %s153 = sphi 0, %s152
      %s167 = sphi 0, %s153
      %s171 = sphi 0, %s171
      %s173 = sphi 0, %s171
      %s174 = sphi 0, %s173
      %s188 = sphi 0, %s174
      %s194 = sphi 0, %s196
      %s197 = sphi 0, %s194
      %s198 = sphi 0, %s197
      %s214 = sphi 0, %s198
    $region4: #{tpu_custom_call.1} parent=1 // loop_header_branch
      %20 = sbr.rel (%p18) target = $region8
    $region5: #{tpu_custom_call.1} parent=1 // loop_body
      %s22 = ssub.s32 %s17, 1
      %s23 = ssub.s32 %s17, 2
      %s24 = sadd.s32 %s17, 1
      %s25 = ssub.s32 %s17, %s24
      %p26 = scmp.eq.s32.totalorder %s25, 0
      %s28 = sadd.s32 %s27, 1
      %s29 = scalar_select %p26, %s27, %s28
      %p32 = pneg %p26
      %p33 = scmp.eq.s32.totalorder %s17, 1
      %p34 = por %p32, %p33
      %p35 = scmp.ne.s32.totalorder %s27, %s30
      %p36 = scmp.eq.s32.totalorder %s17, 0
      %p37 = por %p35, %p36
      %p38 = scmp.ne.s32.totalorder %s27, %s30
      %p39 = scmp.eq.s32.totalorder %s22, 1
      %p40 = por %p38, %p39
      %p41 = scmp.ne.s32.totalorder %s30, %s31
      %p42 = scmp.eq.s32.totalorder %s22, 0
      %p43 = por %p41, %p42
      %p44 = scmp.ne.s32.totalorder %s30, %s31
      %p45 = scmp.eq.s32.totalorder %s23, 1
      %p46 = por %p44, %p45
      %p48 = scmp.ne.s32.totalorder %s31, %s47
      %p49 = scmp.eq.s32.totalorder %s23, 0
      %p50 = por %p48, %p49
      %s51 = ssub.s32 %s17, %s24
      %p52 = scmp.eq.s32.totalorder %s51, 0
      %s54 = sadd.s32 %s53, 1
      %s55 = scalar_select %p52, %s53, %s54
      %p58 = pneg %p52
      %p59 = scmp.eq.s32.totalorder %s17, 1
      %p60 = por %p58, %p59
      %p61 = scmp.ne.s32.totalorder %s53, %s56
      %p62 = scmp.eq.s32.totalorder %s17, 0
      %p63 = por %p61, %p62
      %p64 = scmp.ne.s32.totalorder %s53, %s56
      %p65 = scmp.eq.s32.totalorder %s22, 1
      %p66 = por %p64, %p65
      %p67 = scmp.ne.s32.totalorder %s56, %s57
      %p68 = scmp.eq.s32.totalorder %s22, 0
      %p69 = por %p67, %p68
      %p70 = scmp.ne.s32.totalorder %s56, %s57
      %p71 = scmp.eq.s32.totalorder %s23, 1
      %p72 = por %p70, %p71
      %p74 = scmp.ne.s32.totalorder %s57, %s73
      %p75 = scmp.eq.s32.totalorder %s23, 0
      %p76 = por %p74, %p75
      %s77 = ssub.s32 %s17, %s24
      %p78 = scmp.eq.s32.totalorder %s77, 0
      %s80 = sadd.s32 %s79, 1
      %s81 = scalar_select %p78, %s79, %s80
      %p84 = pneg %p78
      %p85 = scmp.eq.s32.totalorder %s17, 1
      %p86 = por %p84, %p85
      %p87 = scmp.ne.s32.totalorder %s79, %s82
      %p88 = scmp.eq.s32.totalorder %s17, 0
      %p89 = por %p87, %p88
      %p90 = scmp.ne.s32.totalorder %s79, %s82
      %p91 = scmp.eq.s32.totalorder %s22, 1
      %p92 = por %p90, %p91
      %p93 = scmp.ne.s32.totalorder %s82, %s83
      %p94 = scmp.eq.s32.totalorder %s22, 0
      %p95 = por %p93, %p94
      %p96 = scmp.ne.s32.totalorder %s82, %s83
      %p97 = scmp.eq.s32.totalorder %s23, 1
      %p98 = por %p96, %p97
      %p100 = scmp.ne.s32.totalorder %s83, %s99
      %p101 = scmp.eq.s32.totalorder %s23, 0
      %p102 = por %p100, %p101
      %s103 = ssub.s32 %s17, %s24
      %p104 = scmp.eq.s32.totalorder %s103, 0
      %s106 = sadd.s32 %s105, 1
      %s107 = scalar_select %p104, %s105, %s106
      %p110 = pneg %p104
      %p111 = scmp.eq.s32.totalorder %s17, 1
      %p112 = por %p110, %p111
      %p113 = scmp.ne.s32.totalorder %s105, %s108
      %p114 = scmp.eq.s32.totalorder %s17, 0
      %p115 = por %p113, %p114
      %p116 = scmp.ne.s32.totalorder %s105, %s108
      %p117 = scmp.eq.s32.totalorder %s22, 1
      %p118 = por %p116, %p117
      %p119 = scmp.ne.s32.totalorder %s108, %s109
      %p120 = scmp.eq.s32.totalorder %s22, 0
      %p121 = por %p119, %p120
      %p122 = scmp.ne.s32.totalorder %s108, %s109
      %p123 = scmp.eq.s32.totalorder %s23, 1
      %p124 = por %p122, %p123
      %p126 = scmp.ne.s32.totalorder %s109, %s125
      %p127 = scmp.eq.s32.totalorder %s23, 0
      %p128 = por %p126, %p127
      %s130 = sadd.s32 %s129, 1
      %p133 = scmp.eq.s32.totalorder %s17, 1
      %p134 = scmp.ne.s32.totalorder %s129, %s131
      %p135 = scmp.eq.s32.totalorder %s17, 0
      %p136 = por %p134, %p135
      %p137 = scmp.ne.s32.totalorder %s129, %s131
      %p138 = scmp.eq.s32.totalorder %s22, 1
      %p139 = por %p137, %p138
      %p140 = scmp.ne.s32.totalorder %s131, %s132
      %p141 = scmp.eq.s32.totalorder %s22, 0
      %p142 = por %p140, %p141
      %p143 = scmp.ne.s32.totalorder %s131, %s132
      %p144 = scmp.eq.s32.totalorder %s23, 1
      %p145 = por %p143, %p144
      %p147 = scmp.ne.s32.totalorder %s132, %s146
      %p148 = scmp.eq.s32.totalorder %s23, 0
      %p149 = por %p147, %p148
      %s151 = sadd.s32 %s150, 1
      %p154 = scmp.eq.s32.totalorder %s17, 1
      %p155 = scmp.ne.s32.totalorder %s150, %s152
      %p156 = scmp.eq.s32.totalorder %s17, 0
      %p157 = por %p155, %p156
      %p158 = scmp.ne.s32.totalorder %s150, %s152
      %p159 = scmp.eq.s32.totalorder %s22, 1
      %p160 = por %p158, %p159
      %p161 = scmp.ne.s32.totalorder %s152, %s153
      %p162 = scmp.eq.s32.totalorder %s22, 0
      %p163 = por %p161, %p162
      %p164 = scmp.ne.s32.totalorder %s152, %s153
      %p165 = scmp.eq.s32.totalorder %s23, 1
      %p166 = por %p164, %p165
      %p168 = scmp.ne.s32.totalorder %s153, %s167
      %p169 = scmp.eq.s32.totalorder %s23, 0
      %p170 = por %p168, %p169
      %s172 = sadd.s32 %s171, 1
      %p175 = scmp.eq.s32.totalorder %s17, 1
      %p176 = scmp.ne.s32.totalorder %s171, %s173
      %p177 = scmp.eq.s32.totalorder %s17, 0
      %p178 = por %p176, %p177
      %p179 = scmp.ne.s32.totalorder %s171, %s173
      %p180 = scmp.eq.s32.totalorder %s22, 1
      %p181 = por %p179, %p180
      %p182 = scmp.ne.s32.totalorder %s173, %s174
      %p183 = scmp.eq.s32.totalorder %s22, 0
      %p184 = por %p182, %p183
      %p185 = scmp.ne.s32.totalorder %s173, %s174
      %p186 = scmp.eq.s32.totalorder %s23, 1
      %p187 = por %p185, %p186
      %p189 = scmp.ne.s32.totalorder %s174, %s188
      %p190 = scmp.eq.s32.totalorder %s23, 0
      %p191 = por %p189, %p190
      %s192 = ssub.s32 %s17, %s24
      %p193 = scmp.eq.s32.totalorder %s192, 0
      %s195 = sadd.s32 %s194, 1
      %s196 = scalar_select %p193, %s194, %s195
      %p199 = pneg %p193
      %p200 = scmp.eq.s32.totalorder %s17, 1
      %p201 = por %p199, %p200
      %p202 = scmp.ne.s32.totalorder %s194, %s197
      %p203 = scmp.eq.s32.totalorder %s17, 0
      %p204 = por %p202, %p203
      %p205 = scmp.ne.s32.totalorder %s194, %s197
      %p206 = scmp.eq.s32.totalorder %s22, 1
      %p207 = por %p205, %p206
      %p208 = scmp.ne.s32.totalorder %s197, %s198
      %p209 = scmp.eq.s32.totalorder %s22, 0
      %p210 = por %p208, %p209
      %p211 = scmp.ne.s32.totalorder %s197, %s198
      %p212 = scmp.eq.s32.totalorder %s23, 1
      %p213 = por %p211, %p212
      %p215 = scmp.ne.s32.totalorder %s198, %s214
      %p216 = scmp.eq.s32.totalorder %s23, 0
      %p217 = por %p215, %p216
      %p218 = scmp.le.s32.totalorder 1, %s17
      %p219 = scmp.lt.s32.totalorder %s17, 3
      %p220 = pnand %p218, %p219
      %p221 = pneg %p220
      // Predicated region
      $region9: #{tpu_custom_call.1} parent=5 // pred_check
        _
      $region10: #{tpu_custom_call.1} parent=5 // pred_check_branch
        %223 = sbr.rel (%p220) target = $region12
      $region11: #{tpu_custom_call.1} parent=5 // pred_region
        %s224 = ssub.s32 %s17, 1
        // Predicated region
        $region13: #{tpu_custom_call.1} parent=11 // pred_check
          %p225 = pneg %p142
        $region14: #{tpu_custom_call.1} parent=11 // pred_check_branch
          %227 = sbr.rel (%p225) target = $region16
        $region15: #{tpu_custom_call.1} parent=11 // pred_region
          _
        $region16: #{tpu_custom_call.1} parent=11 // pred_fallthru
          _
        // Predicated region
        $region17: #{tpu_custom_call.1} parent=11 // pred_check
          %p228 = pneg %p163
        $region18: #{tpu_custom_call.1} parent=11 // pred_check_branch
          %230 = sbr.rel (%p228) target = $region20
        $region19: #{tpu_custom_call.1} parent=11 // pred_region
          _
        $region20: #{tpu_custom_call.1} parent=11 // pred_fallthru
          _
        // Predicated region
        $region21: #{tpu_custom_call.1} parent=11 // pred_check
          %p231 = pneg %p184
        $region22: #{tpu_custom_call.1} parent=11 // pred_check_branch
          %233 = sbr.rel (%p231) target = $region24
        $region23: #{tpu_custom_call.1} parent=11 // pred_region
          %s235 = ssub.s32 16, 16
          %236 = vsyncadd [#allocation4], %s235
          %s238 = sshll.u32 %s6, 4
          %s239 = int_to_ptr.vmem [resolvable:$true] %s238
          %241 = dma.vmem_to_smem %s239, 16, [#allocation2], [#allocation4]
        $region24: #{tpu_custom_call.1} parent=11 // pred_fallthru
          _
      $region12: #{tpu_custom_call.1} parent=5 // pred_fallthru
        _
      %p242 = scmp.lt.s32.totalorder %s17, 2
      // Predicated region
      $region25: #{tpu_custom_call.1} parent=5 // pred_check
        %p243 = pneg %p242
      $region26: #{tpu_custom_call.1} parent=5 // pred_check_branch
        %245 = sbr.rel (%p243) target = $region28
      $region27: #{tpu_custom_call.1} parent=5 // pred_region
        // Predicated region
        $region29: #{tpu_custom_call.1} parent=27 // pred_check
          %p246 = pneg %p37
        $region30: #{tpu_custom_call.1} parent=27 // pred_check_branch
          %248 = sbr.rel (%p246) target = $region32
        $region31: #{tpu_custom_call.1} parent=27 // pred_region
          %p249 = scmp.lt.s32.totalorder %s17, 1
          %s250 = scalar_select %p249, %s17, 1
          %s251 = scalar_lea.vmem %s0, %s250
        $region32: #{tpu_custom_call.1} parent=27 // pred_fallthru
          _
        // Predicated region
        $region33: #{tpu_custom_call.1} parent=27 // pred_check
          %p252 = pneg %p63
        $region34: #{tpu_custom_call.1} parent=27 // pred_check_branch
          %254 = sbr.rel (%p252) target = $region36
        $region35: #{tpu_custom_call.1} parent=27 // pred_region
          %p255 = scmp.lt.s32.totalorder %s17, 1
          %s256 = scalar_select %p255, %s17, 1
          %s257 = smul.addr %s256, 2
          %s258 = scalar_lea.vmem %s1, %s257
        $region36: #{tpu_custom_call.1} parent=27 // pred_fallthru
          _
        // Predicated region
        $region37: #{tpu_custom_call.1} parent=27 // pred_check
          %p259 = pneg %p89
        $region38: #{tpu_custom_call.1} parent=27 // pred_check_branch
          %261 = sbr.rel (%p259) target = $region40
        $region39: #{tpu_custom_call.1} parent=27 // pred_region
          %p262 = scmp.lt.s32.totalorder %s17, 1
          %s263 = scalar_select %p262, %s17, 1
          %s264 = smul.addr %s263, 2
          %s265 = smul.addr %s264, 8
          %s266 = scalar_lea.vmem %s2, %s265
        $region40: #{tpu_custom_call.1} parent=27 // pred_fallthru
          _
        // Predicated region
        $region41: #{tpu_custom_call.1} parent=27 // pred_check
          %p267 = pneg %p115
        $region42: #{tpu_custom_call.1} parent=27 // pred_check_branch
          %269 = sbr.rel (%p267) target = $region44
        $region43: #{tpu_custom_call.1} parent=27 // pred_region
          %p270 = scmp.lt.s32.totalorder %s17, 1
          %s271 = scalar_select %p270, %s17, 1
          %s272 = scalar_lea.vmem %s3, %s271
        $region44: #{tpu_custom_call.1} parent=27 // pred_fallthru
          _
      $region28: #{tpu_custom_call.1} parent=5 // pred_fallthru
        _
      %p273 = scmp.le.s32.totalorder 1, %s17
      %p274 = scmp.lt.s32.totalorder %s17, 3
      %p275 = pnand %p273, %p274
      %p276 = pneg %p275
      // Predicated region
      $region45: #{tpu_custom_call.1} parent=5 // pred_check
        _
      $region46: #{tpu_custom_call.1} parent=5 // pred_check_branch
        %278 = sbr.rel (%p275) target = $region48
      $region47: #{tpu_custom_call.1} parent=5 // pred_region
        %s279 = ssub.s32 %s17, 1
        // Predicated region
        $region49: #{tpu_custom_call.1} parent=47 // pred_check
          %p280 = pneg %p184
        $region50: #{tpu_custom_call.1} parent=47 // pred_check_branch
          %282 = sbr.rel (%p280) target = $region52
        $region51: #{tpu_custom_call.1} parent=47 // pred_region
          %283 = dma.done [#allocation4], 16
        $region52: #{tpu_custom_call.1} parent=47 // pred_fallthru
          _
        %284 = sfence
        %p285 = scmp.lt.s32.totalorder %s22, 1
        %s286 = scalar_select %p285, %s22, 1
        %s287 = scalar_lea.vmem %s0, %s286
        %p288 = pneg %p43
        %p289 = pneg %p40
        %p290 = scmp.lt.s32.totalorder %s22, 1
        %s291 = scalar_select %p290, %s22, 1
        %s292 = smul.addr %s291, 2
        %s293 = scalar_lea.vmem %s1, %s292
        %p294 = pneg %p69
        %p295 = pneg %p66
        %p296 = scmp.lt.s32.totalorder %s22, 1
        %s297 = scalar_select %p296, %s22, 1
        %s298 = smul.addr %s297, 2
        %s299 = smul.addr %s298, 8
        %s300 = scalar_lea.vmem %s2, %s299
        %p301 = pneg %p95
        %p302 = pneg %p92
        %p303 = scmp.lt.s32.totalorder %s22, 1
        %s304 = scalar_select %p303, %s22, 1
        %s305 = scalar_lea.vmem %s3, %s304
        %p306 = pneg %p121
        %p307 = pneg %p118
        %p308 = pneg %p142
        %p309 = pneg %p139
        %p310 = pneg %p163
        %p311 = pneg %p160
        %p312 = pneg %p184
        %p313 = pneg %p181
        %p314 = pneg %p210
        %p315 = pneg %p207
        %s316 = sand.u32 %s197, 1
        %s317 = scalar_lea.sflag [#allocation3], %s316
        %s318 = sand.u32 %s197, 1
        %s319 = scalar_lea.vmem [#allocation5], %s318
        %p320 = scmp.lt.s32.totalorder %s22, 1
        %s321 = scalar_select %p320, %s22, 1
        %s322 = scalar_lea.vmem %s0, %s321
        %p323 = scmp.lt.s32.totalorder %s22, 1
        %s324 = scalar_select %p323, %s22, 1
        %s325 = smul.addr %s324, 2
        %s326 = scalar_lea.vmem %s1, %s325
        %p327 = scmp.lt.s32.totalorder %s22, 1
        %s328 = scalar_select %p327, %s22, 1
        %s329 = smul.addr %s328, 2
        %s330 = smul.addr %s329, 8
        %s331 = scalar_lea.vmem %s2, %s330
        %p332 = scmp.lt.s32.totalorder %s22, 1
        %s333 = scalar_select %p332, %s22, 1
        %s334 = scalar_lea.vmem %s3, %s333
        %v335 = vld [vmem:[%s322] sm:$0x1]
        %v336 = vld [vmem:[%s4] sm:$0x3]
        %vm337 = vcmask 15360
        %v339 = vsel %vm337, %v335, 0
        %vm341 = vcmask 1041408
        %v343 = vsel %vm341, %v336, 0
        %345 = vmatprep.subr.mxu0 0.0
        %346 = vmatpush1.msra.mxu0 %v343
        %347 = vmatprep.subr.mxu0 0.0
        %348 = vmatpush1.msra.mxu0 0.0
        %349 = vmatprep.subr.mxu0 0.0
        %350 = vmatpush1.msra.mxu0 0.0
        %351 = vmatprep.subr.mxu0 0.0
        %352 = vmatpush1.msra.mxu0 0.0
        %353 = vmatprep.subr.mxu0 0.0
        %354 = vmatpush1.msra.mxu0 0.0
        %355 = vmatprep.subr.mxu0 0.0
        %356 = vmatpush1.msra.mxu0 0.0
        %357 = vmatprep.subr.mxu0 0.0
        %358 = vmatpush1.msra.mxu0 0.0
        %359 = vmatprep.subr.mxu0 0.0
        %360 = vmatpush1.msra.mxu0 0.0
        %361 = vmatprep.subr.mxu0 0.0
        %362 = vmatpush1.msra.mxu0 0.0
        %363 = vmatprep.subr.mxu0 0.0
        %364 = vmatpush1.msra.mxu0 0.0
        %365 = vmatprep.subr.mxu0 0.0
        %366 = vmatpush1.msra.mxu0 0.0
        %367 = vmatprep.subr.mxu0 0.0
        %368 = vmatpush1.msra.mxu0 0.0
        %369 = vmatprep.subr.mxu0 0.0
        %370 = vmatpush1.msra.mxu0 0.0
        %371 = vmatprep.subr.mxu0 0.0
        %372 = vmatpush1.msra.mxu0 0.0
        %373 = vmatprep.subr.mxu0 0.0
        %374 = vmatpush1.msra.mxu0 0.0
        %375 = vmatprep.subr.mxu0 0.0
        %376 = vmatpush1.msra.mxu0 0.0
        %377 = vmatprep.subr.mxu0 0.0
        %378 = vmatpush1.msra.mxu0 0.0
        %379 = vmatprep.subr.mxu0 0.0
        %380 = vmatpush1.msra.mxu0 0.0
        %381 = vmatprep.subr.mxu0 0.0
        %382 = vmatpush1.msra.mxu0 0.0
        %383 = vmatprep.subr.mxu0 0.0
        %384 = vmatpush1.msra.mxu0 0.0
        %385 = vmatprep.subr.mxu0 0.0
        %386 = vmatpush1.msra.mxu0 0.0
        %387 = vmatprep.subr.mxu0 0.0
        %388 = vmatpush1.msra.mxu0 0.0
        %389 = vmatprep.subr.mxu0 0.0
        %390 = vmatpush1.msra.mxu0 0.0
        %391 = vmatprep.subr.mxu0 0.0
        %392 = vmatpush1.msra.mxu0 0.0
        %393 = vmatprep.subr.mxu0 0.0
        %394 = vmatpush1.msra.mxu0 0.0
        %395 = vmatprep.subr.mxu0 0.0
        %396 = vmatpush1.msra.mxu0 0.0
        %397 = vmatprep.subr.mxu0 0.0
        %398 = vmatpush1.msra.mxu0 0.0
        %399 = vmatprep.subr.mxu0 0.0
        %400 = vmatpush1.msra.mxu0 0.0
        %401 = vmatprep.subr.mxu0 0.0
        %402 = vmatpush1.msra.mxu0 0.0
        %403 = vmatprep.subr.mxu0 0.0
        %404 = vmatpush1.msra.mxu0 0.0
        %405 = vmatprep.subr.mxu0 0.0
        %406 = vmatpush1.msra.mxu0 0.0
        %407 = vmatprep.subr.mxu0 0.0
        %408 = vmatpush1.msra.mxu0 0.0
        %409 = vmatprep.mubr.f32.mxu0 0.0
        %410 = vmatmul.mubr.f32.gmra.mrb[0].mxu0 %v339
        %v411 = vpop.f32.mrb[0].mxu0
        %v412 = vadd.f32 0.0, %v411
        %v413 = vpop.f32.mrb[0].mxu0
        %414 = vdwg.mxu0
        %v415 = vld [vmem:[%s5] sm:$0xff]
        %v416 = vld [vmem:[%s326] sm:$0x3]
        %v418 = vsel %vm337, %v415, 0
        %v421 = vsel %vm341, %v416, 0
        %423 = vmatprep.subr.mxu0 0.0
        %424 = vmatpush1.msra.mxu0 %v421
        %425 = vmatprep.subr.mxu0 0.0
        %426 = vmatpush1.msra.mxu0 0.0
        %427 = vmatprep.subr.mxu0 0.0
        %428 = vmatpush1.msra.mxu0 0.0
        %429 = vmatprep.subr.mxu0 0.0
        %430 = vmatpush1.msra.mxu0 0.0
        %431 = vmatprep.subr.mxu0 0.0
        %432 = vmatpush1.msra.mxu0 0.0
        %433 = vmatprep.subr.mxu0 0.0
        %434 = vmatpush1.msra.mxu0 0.0
        %435 = vmatprep.subr.mxu0 0.0
        %436 = vmatpush1.msra.mxu0 0.0
        %437 = vmatprep.subr.mxu0 0.0
        %438 = vmatpush1.msra.mxu0 0.0
        %439 = vmatprep.subr.mxu0 0.0
        %440 = vmatpush1.msra.mxu0 0.0
        %441 = vmatprep.subr.mxu0 0.0
        %442 = vmatpush1.msra.mxu0 0.0
        %443 = vmatprep.subr.mxu0 0.0
        %444 = vmatpush1.msra.mxu0 0.0
        %445 = vmatprep.subr.mxu0 0.0
        %446 = vmatpush1.msra.mxu0 0.0
        %447 = vmatprep.subr.mxu0 0.0
        %448 = vmatpush1.msra.mxu0 0.0
        %449 = vmatprep.subr.mxu0 0.0
        %450 = vmatpush1.msra.mxu0 0.0
        %451 = vmatprep.subr.mxu0 0.0
        %452 = vmatpush1.msra.mxu0 0.0
        %453 = vmatprep.subr.mxu0 0.0
        %454 = vmatpush1.msra.mxu0 0.0
        %455 = vmatprep.subr.mxu0 0.0
        %456 = vmatpush1.msra.mxu0 0.0
        %457 = vmatprep.subr.mxu0 0.0
        %458 = vmatpush1.msra.mxu0 0.0
        %459 = vmatprep.subr.mxu0 0.0
        %460 = vmatpush1.msra.mxu0 0.0
        %461 = vmatprep.subr.mxu0 0.0
        %462 = vmatpush1.msra.mxu0 0.0
        %463 = vmatprep.subr.mxu0 0.0
        %464 = vmatpush1.msra.mxu0 0.0
        %465 = vmatprep.subr.mxu0 0.0
        %466 = vmatpush1.msra.mxu0 0.0
        %467 = vmatprep.subr.mxu0 0.0
        %468 = vmatpush1.msra.mxu0 0.0
        %469 = vmatprep.subr.mxu0 0.0
        %470 = vmatpush1.msra.mxu0 0.0
        %471 = vmatprep.subr.mxu0 0.0
        %472 = vmatpush1.msra.mxu0 0.0
        %473 = vmatprep.subr.mxu0 0.0
        %474 = vmatpush1.msra.mxu0 0.0
        %475 = vmatprep.subr.mxu0 0.0
        %476 = vmatpush1.msra.mxu0 0.0
        %477 = vmatprep.subr.mxu0 0.0
        %478 = vmatpush1.msra.mxu0 0.0
        %479 = vmatprep.subr.mxu0 0.0
        %480 = vmatpush1.msra.mxu0 0.0
        %481 = vmatprep.subr.mxu0 0.0
        %482 = vmatpush1.msra.mxu0 0.0
        %483 = vmatprep.subr.mxu0 0.0
        %484 = vmatpush1.msra.mxu0 0.0
        %485 = vmatprep.subr.mxu0 0.0
        %486 = vmatpush1.msra.mxu0 0.0
        %487 = vmatprep.mubr.f32.mxu0 0.0
        %488 = vmatmul.mubr.f32.gmra.mrb[0].mxu0 %v418
        %v489 = vpop.f32.mrb[0].mxu0
        %v490 = vadd.f32 0.0, %v489
        %v491 = vpop.f32.mrb[0].mxu0
        %492 = vdwg.mxu0
        %494 = vset.pattern.permute.xlu0 0
        %495 = vperm.xlu0 %494, %v412
        %v496 = vpop.permute.xlu0 %495
        %v498 = vadd.f32 %v496, %v490
        %v499 = vtanh.pop %v498
        %s500 = sld [smem:[#allocation2]]
        %v501 = vstv %s500
        %v502 = vmul.f32 %v501, %v499
        %v503 = vadd.f32 %v502, 0.0
        %504 = vset.pattern.permute.xlu0 1
        %505 = vperm.xlu0 %504, %v412
        %v506 = vpop.permute.xlu0 %505
        %v509 = vrot.slane %v490, 1
        %v511 = vadd.f32 %v506, %v509
        %v512 = vtanh.pop %v511
        %s513 = sld [smem:[#allocation2 + $0x1]]
        %v514 = vstv %s513
        %v515 = vmul.f32 %v514, %v512
        %v516 = vadd.f32 %v503, %v515
        %517 = vset.pattern.permute.xlu0 2
        %518 = vperm.xlu0 %517, %v412
        %v519 = vpop.permute.xlu0 %518
        %v521 = vrot.slane %v490, 2
        %v523 = vadd.f32 %v519, %v521
        %v524 = vtanh.pop %v523
        %s525 = sld [smem:[#allocation2 + $0x2]]
        %v526 = vstv %s525
        %v527 = vmul.f32 %v526, %v524
        %v528 = vadd.f32 %v516, %v527
        %529 = vset.pattern.permute.xlu0 3
        %530 = vperm.xlu0 %529, %v412
        %v531 = vpop.permute.xlu0 %530
        %v533 = vrot.slane %v490, 3
        %v535 = vadd.f32 %v531, %v533
        %v536 = vtanh.pop %v535
        %s537 = sld [smem:[#allocation2 + $0x3]]
        %v538 = vstv %s537
        %v539 = vmul.f32 %v538, %v536
        %v540 = vadd.f32 %v528, %v539
        %541 = vset.pattern.permute.xlu0 4
        %542 = vperm.xlu0 %541, %v412
        %v543 = vpop.permute.xlu0 %542
        %v545 = vrot.slane %v490, 4
        %v547 = vadd.f32 %v543, %v545
        %v548 = vtanh.pop %v547
        %s549 = sld [smem:[#allocation2 + $0x4]]
        %v550 = vstv %s549
        %v551 = vmul.f32 %v550, %v548
        %v552 = vadd.f32 %v540, %v551
        %553 = vset.pattern.permute.xlu0 5
        %554 = vperm.xlu0 %553, %v412
        %v555 = vpop.permute.xlu0 %554
        %v557 = vrot.slane %v490, 5
        %v559 = vadd.f32 %v555, %v557
        %v560 = vtanh.pop %v559
        %s561 = sld [smem:[#allocation2 + $0x5]]
        %v562 = vstv %s561
        %v563 = vmul.f32 %v562, %v560
        %v564 = vadd.f32 %v552, %v563
        %565 = vset.pattern.permute.xlu0 6
        %566 = vperm.xlu0 %565, %v412
        %v567 = vpop.permute.xlu0 %566
        %v569 = vrot.slane %v490, 6
        %v571 = vadd.f32 %v567, %v569
        %v572 = vtanh.pop %v571
        %s573 = sld [smem:[#allocation2 + $0x6]]
        %v574 = vstv %s573
        %v575 = vmul.f32 %v574, %v572
        %v576 = vadd.f32 %v564, %v575
        %577 = vset.pattern.permute.xlu0 7
        %578 = vperm.xlu0 %577, %v412
        %v579 = vpop.permute.xlu0 %578
        %v581 = vrot.slane %v490, 7
        %v583 = vadd.f32 %v579, %v581
        %v584 = vtanh.pop %v583
        %s585 = sld [smem:[#allocation2 + $0x7]]
        %v586 = vstv %s585
        %v587 = vmul.f32 %v586, %v584
        %v588 = vadd.f32 %v576, %v587
        %v589 = vld [vmem:[%s334] sm:$0x1]
        %v590 = vlaneseq
        %v591 = vand.u32 %v590, 127
        %592 = vset.pattern.permute.xlu0 0
        %593 = vperm.xlu0 %592, %v589
        %v594 = vpop.permute.xlu0 %593
        %v595 = vlaneseq
        %v596 = vshrl.u32 %v595, 7
        %v597 = vsub.s32 0, %v596
        %v598 = vrot.slane %v594, %v597
        %vm599 = vcmp.lt.s32.totalorder %v591, %v598
        %v600 = vsel %vm599, %v588, -1000000.0
        %vm601 = vcmask 73728
        %v602 = vsel %vm601, %v600, -inf
        %603 = vmax.xlane.f32.xlu0 %v602
        %v604 = vpop.xlane.xlu0 %603
        %v605 = vsub.f32 %v600, %v604
        %v606 = vmul.f32 %v605, 1.442695
        %v607 = vpow.pop %v606
        %v608 = vsel %vm601, %v607, 0.0
        %609 = vadd.xlane.f32.xlu0 %v608
        %v610 = vpop.xlane.xlu0 %609
        %v611 = vrcp.pop %v610
        %v612 = vmul.f32 %v607, %v611
        %v613 = vld [vmem:[%s331] sm:$0xff]
        %v614 = vld [vmem:[%s331 + $0x8] sm:$0x3]
        %vm615 = vcmask 80896
        %v617 = vsel %vm615, %v612, 0
        %v620 = vsel %vm341, %v614, 0
        %622 = vmatprep.subr.mxu0 0.0
        %623 = vmatpush1.msra.mxu0 %v613
        %624 = vmatprep.subr.mxu0 0.0
        %625 = vmatpush1.msra.mxu0 %v620
        %626 = vmatprep.subr.mxu0 0.0
        %627 = vmatpush1.msra.mxu0 0.0
        %628 = vmatprep.subr.mxu0 0.0
        %629 = vmatpush1.msra.mxu0 0.0
        %630 = vmatprep.subr.mxu0 0.0
        %631 = vmatpush1.msra.mxu0 0.0
        %632 = vmatprep.subr.mxu0 0.0
        %633 = vmatpush1.msra.mxu0 0.0
        %634 = vmatprep.subr.mxu0 0.0
        %635 = vmatpush1.msra.mxu0 0.0
        %636 = vmatprep.subr.mxu0 0.0
        %637 = vmatpush1.msra.mxu0 0.0
        %638 = vmatprep.subr.mxu0 0.0
        %639 = vmatpush1.msra.mxu0 0.0
        %640 = vmatprep.subr.mxu0 0.0
        %641 = vmatpush1.msra.mxu0 0.0
        %642 = vmatprep.subr.mxu0 0.0
        %643 = vmatpush1.msra.mxu0 0.0
        %644 = vmatprep.subr.mxu0 0.0
        %645 = vmatpush1.msra.mxu0 0.0
        %646 = vmatprep.subr.mxu0 0.0
        %647 = vmatpush1.msra.mxu0 0.0
        %648 = vmatprep.subr.mxu0 0.0
        %649 = vmatpush1.msra.mxu0 0.0
        %650 = vmatprep.subr.mxu0 0.0
        %651 = vmatpush1.msra.mxu0 0.0
        %652 = vmatprep.subr.mxu0 0.0
        %653 = vmatpush1.msra.mxu0 0.0
        %654 = vmatprep.subr.mxu0 0.0
        %655 = vmatpush1.msra.mxu0 0.0
        %656 = vmatprep.subr.mxu0 0.0
        %657 = vmatpush1.msra.mxu0 0.0
        %658 = vmatprep.subr.mxu0 0.0
        %659 = vmatpush1.msra.mxu0 0.0
        %660 = vmatprep.subr.mxu0 0.0
        %661 = vmatpush1.msra.mxu0 0.0
        %662 = vmatprep.subr.mxu0 0.0
        %663 = vmatpush1.msra.mxu0 0.0
        %664 = vmatprep.subr.mxu0 0.0
        %665 = vmatpush1.msra.mxu0 0.0
        %666 = vmatprep.subr.mxu0 0.0
        %667 = vmatpush1.msra.mxu0 0.0
        %668 = vmatprep.subr.mxu0 0.0
        %669 = vmatpush1.msra.mxu0 0.0
        %670 = vmatprep.subr.mxu0 0.0
        %671 = vmatpush1.msra.mxu0 0.0
        %672 = vmatprep.subr.mxu0 0.0
        %673 = vmatpush1.msra.mxu0 0.0
        %674 = vmatprep.subr.mxu0 0.0
        %675 = vmatpush1.msra.mxu0 0.0
        %676 = vmatprep.subr.mxu0 0.0
        %677 = vmatpush1.msra.mxu0 0.0
        %678 = vmatprep.subr.mxu0 0.0
        %679 = vmatpush1.msra.mxu0 0.0
        %680 = vmatprep.subr.mxu0 0.0
        %681 = vmatpush1.msra.mxu0 0.0
        %682 = vmatprep.subr.mxu0 0.0
        %683 = vmatpush1.msra.mxu0 0.0
        %684 = vmatprep.subr.mxu0 0.0
        %685 = vmatpush1.msra.mxu0 0.0
        %686 = vmatprep.mubr.f32.mxu0 0.0
        %687 = vmatmul.mubr.f32.gmra.mrb[0].mxu0 %v617
        %v688 = vpop.f32.mrb[0].mxu0
        %v689 = vadd.f32 0.0, %v688
        %v690 = vpop.f32.mrb[0].mxu0
        %691 = vdwg.mxu0
        %vm692 = vcmask 24576
        %693 = vst.msk [vmem:[%s319] sm:$0x1] %vm692, %v689
        %s694 = sand.u32 %s197, 1
        %s695 = scalar_lea.sflag [#allocation3], %s694
        %s696 = sand.u32 %s197, 1
        %s697 = scalar_lea.vmem [#allocation5], %s696
        // Predicated region
        $region53: #{tpu_custom_call.1} parent=47 // pred_check
          %p698 = pneg %p207
        $region54: #{tpu_custom_call.1} parent=47 // pred_check_branch
          %700 = sbr.rel (%p698) target = $region56
        $region55: #{tpu_custom_call.1} parent=47 // pred_region
          %s702 = ssub.s32 16, 16
          %703 = vsyncadd %s695, %s702
          %s704 = smul.addr %s22, 16
          %s705 = scalar_lea.hbm %s7, %s704
          %s707 = sshll.u32 %s697, 4
          %s708 = int_to_ptr.vmem [resolvable:$true] %s707
          %710 = dma.vmem_to_hbm [thread:$0]  %s708, 16, %s705, %s695
        $region56: #{tpu_custom_call.1} parent=47 // pred_fallthru
          _
      $region48: #{tpu_custom_call.1} parent=5 // pred_fallthru
        _
      %p711 = scmp.le.s32.totalorder 2, %s17
      // Predicated region
      $region57: #{tpu_custom_call.1} parent=5 // pred_check
        %p712 = pneg %p711
      $region58: #{tpu_custom_call.1} parent=5 // pred_check_branch
        %714 = sbr.rel (%p712) target = $region60
      $region59: #{tpu_custom_call.1} parent=5 // pred_region
        %s715 = ssub.s32 %s17, 2
        // Predicated region
        $region61: #{tpu_custom_call.1} parent=59 // pred_check
          %p716 = pneg %p213
        $region62: #{tpu_custom_call.1} parent=59 // pred_check_branch
          %718 = sbr.rel (%p716) target = $region64
        $region63: #{tpu_custom_call.1} parent=59 // pred_region
          %s719 = sand.u32 %s198, 1
          %s720 = scalar_lea.sflag [#allocation3], %s719
          %s721 = sand.u32 %s198, 1
          %s722 = scalar_lea.vmem [#allocation5], %s721
          %723 = dma.done %s720, 16
        $region64: #{tpu_custom_call.1} parent=59 // pred_fallthru
          _
      $region60: #{tpu_custom_call.1} parent=5 // pred_fallthru
        _
    $region6: #{tpu_custom_call.1} parent=1 // loop_footer
      %s21 = sadd.s32 1, %s17
    $region7: #{tpu_custom_call.1} parent=1 // loop_footer_branch
      %16 = sbr.rel target = $region3
    $region8: #{tpu_custom_call.1} parent=1 // loop_exit
      _
    %724 = vsyncpa [#allocation3], 1
    %s725 = scalar_lea.sflag [#allocation3], 1
    %726 = vsyncpa %s725, 1
    %727 = vsyncpa [#allocation4], 1
    %s728 = scalar_lea.sflag [#allocation4], 1
    %729 = vsyncpa %s728, 1

</llo_original>
